<compile_context>
chip_gen: v5e
topology: v5e:2x2
jax: 0.10.0
libtpu: 0.0.40
codegen_flags: <defaults>
</compile_context>

<pallas_src>
import functools
import math

import jax
import jax.numpy as jnp
from jax.experimental import pallas as pl
from jax.experimental.pallas import tpu as pltpu


# ----------------------------------------------------------------------------
# Tiling helpers
# ----------------------------------------------------------------------------
def _divisor_tile(dim, pref, quantum):
    """Largest multiple-of-`quantum` divisor of `dim` that is <= `pref`.

    Returns the full dim when dim <= pref (always legal: equal-to-full-dim).
    Falls back to the full dim only if no aligned divisor exists (real model
    dims are multiples of 128 so this never fires in practice).
    """
    if dim <= pref:
        return dim
    t = (pref // quantum) * quantum
    while t >= quantum:
        if dim % t == 0:
            return t
        t -= quantum
    return dim


def _linear_tile_prefs():
    """Generation-aware matmul tile preferences.

    v5e/v6e have 128 MiB VMEM -> bigger K blocks (fewer grid steps, better MXU
    residency).  v7x has 64 MiB per TensorCore -> keep tiles moderate.
    """
    try:
        vmem = pltpu.get_tpu_info().vmem_capacity_bytes
    except Exception:
        vmem = 64 * 1024 * 1024
    if vmem >= 100 * 1024 * 1024:
        return 512, 512, 1024          # v5e / v6e
    return 256, 256, 512               # v7x (64 MiB/TC)


# ----------------------------------------------------------------------------
# Tiled linear kernel: y = x @ w_t   (w_t already in [in, out] layout)
# ----------------------------------------------------------------------------
def _matmul_kernel(x_ref, w_ref, o_ref, acc_ref):
    @pl.when(pl.program_id(2) == 0)
    def _():
        acc_ref[...] = jnp.zeros_like(acc_ref)

    acc_ref[...] += jnp.dot(x_ref[...], w_ref[...],
                            preferred_element_type=jnp.float32)

    @pl.when(pl.program_id(2) == pl.num_programs(2) - 1)
    def _():
        o_ref[...] = acc_ref[...].astype(o_ref.dtype)


def linear_nn(x, w_t, *, tm=None, tn=None, tk=None):
    """x: (M, K) bf16, w_t: (K, N) bf16 (pre-transposed weight) -> (M, N) bf16."""
    M, K = x.shape
    K2, N = w_t.shape
    assert K == K2
    tm_p, tn_p, tk_p = _linear_tile_prefs()
    tm = _divisor_tile(M, tm if tm else tm_p, 8)
    tn = _divisor_tile(N, tn if tn else tn_p, 128)
    tk = _divisor_tile(K, tk if tk else tk_p, 128)
    grid = (M // tm, N // tn, K // tk)
    return pl.pallas_call(
        _matmul_kernel,
        out_shape=jax.ShapeDtypeStruct((M, N), x.dtype),
        grid_spec=pltpu.PrefetchScalarGridSpec(
            num_scalar_prefetch=0,
            grid=grid,
            in_specs=[
                pl.BlockSpec((tm, tk), lambda i, j, k: (i, k)),
                pl.BlockSpec((tk, tn), lambda i, j, k: (k, j)),
            ],
            out_specs=pl.BlockSpec((tm, tn), lambda i, j, k: (i, j)),
            scratch_shapes=[pltpu.VMEM((tm, tn), jnp.float32)],
        ),
        compiler_params=pltpu.CompilerParams(
            dimension_semantics=("parallel", "parallel", "arbitrary"),
        ),
        cost_estimate=pl.CostEstimate(
            flops=2 * M * N * K,
            transcendentals=0,
            bytes_accessed=2 * (M * K + K * N + M * N),
        ),
    )(x, w_t)


# ----------------------------------------------------------------------------
# Flash-style GQA attention kernel
#   qg:       (B, Hkv, S*n_rep, hd) bf16  -- rows ordered (position, rep-head)
#   k_cache:  (Bmax, Hkv, Tmax, hd) bf16  -- persistent cache layout, no copies
#   v_cache:  (Bmax, Hkv, Tmax, hd) bf16
#   out:      (B, Hkv, S*n_rep, hd) bf16
# Causal mask is generated in-kernel (key_pos <= start_pos + q_pos).
# ----------------------------------------------------------------------------
_MASK_VALUE = -1e30


def _gqa_flash_kernel(q_ref, k_ref, v_ref, o_ref, m_sc, l_sc, acc_sc,
                      *, scale, start_pos, n_rep, tq, tk):
    qi = pl.program_id(2)
    ki = pl.program_id(3)

    @pl.when(ki == 0)
    def _():
        m_sc[...] = jnp.full_like(m_sc, _MASK_VALUE)
        l_sc[...] = jnp.zeros_like(l_sc)
        acc_sc[...] = jnp.zeros_like(acc_sc)

    # Causal-prefill tile skip: this kv tile contributes only if its first key
    # position can be attended by the *last* query row of this q tile.
    @pl.when(ki * tk < start_pos + (qi + 1) * tq)
    def _():
        q = q_ref[0, 0]                                   # (rows, hd) bf16
        k = k_ref[0, 0]                                   # (tk,   hd) bf16
        v = v_ref[0, 0]                                   # (tk,   hd) bf16
        rows = q.shape[0]                                 # tq * n_rep

        # NT matmul: contract the last dims directly (no k.T / XLU relayout).
        s = jax.lax.dot_general(
            q, k, (((1,), (1,)), ((), ())),
            preferred_element_type=jnp.float32)           # (rows, tk)

        # In-kernel causal mask. Row r covers query position qi*tq + r//n_rep.
        q_pos = (start_pos + qi * tq
                 + jax.lax.broadcasted_iota(jnp.int32, (rows, tk), 0) // n_rep)
        k_pos = ki * tk + jax.lax.broadcasted_iota(jnp.int32, (rows, tk), 1)
        s = jnp.where(k_pos <= q_pos, s * scale, _MASK_VALUE)

        m_prev = m_sc[...]
        m_new = jnp.maximum(m_prev, jnp.max(s, axis=-1, keepdims=True))
        alpha = jnp.exp(m_prev - m_new)
        p = jnp.exp(s - m_new)
        l_sc[...] = alpha * l_sc[...] + jnp.sum(p, axis=-1, keepdims=True)
        acc_sc[...] = alpha * acc_sc[...] + jnp.dot(
            p.astype(v.dtype), v, preferred_element_type=jnp.float32)
        m_sc[...] = m_new

    @pl.when(ki == pl.num_programs(3) - 1)
    def _():
        o_ref[0, 0] = (acc_sc[...] *
                       pl.reciprocal(l_sc[...], approx=False)).astype(o_ref.dtype)


def gqa_attention(qg, k_cache, v_cache, *, start_pos, seqlen, n_rep, scale,
                  tq_pref=128, tk_pref=256):
    B, Hkv, rows_total, hd = qg.shape
    S = seqlen
    assert rows_total == S * n_rep
    max_seq = k_cache.shape[2]
    end_pos = start_pos + S

    tq = _divisor_tile(S, tq_pref, 8)          # query positions per block
    tk = _divisor_tile(max_seq, tk_pref, 8)    # key positions per block
    rows = tq * n_rep                          # q rows per block (all heads of group)
    n_q_blocks = S // tq
    n_kv_blocks = pl.cdiv(end_pos, tk)         # never read past what's needed
    grid = (B, Hkv, n_q_blocks, n_kv_blocks)

    def q_map(b, g, qi, ki):
        return (b, g, qi, 0)

    def kv_map(b, g, qi, ki):
        # Clamp to the last kv tile this q tile actually needs: skipped tiles
        # keep the same block index as the previous step, so Pallas does not
        # re-issue their DMA.
        last = (start_pos + (qi + 1) * tq + tk - 1) // tk - 1
        return (b, g, jnp.minimum(ki, last), 0)

    kernel = functools.partial(_gqa_flash_kernel, scale=scale,
                               start_pos=start_pos, n_rep=n_rep, tq=tq, tk=tk)
    return pl.pallas_call(
        kernel,
        out_shape=jax.ShapeDtypeStruct((B, Hkv, rows_total, hd), qg.dtype),
        grid_spec=pltpu.PrefetchScalarGridSpec(
            num_scalar_prefetch=0,
            grid=grid,
            in_specs=[
                pl.BlockSpec((1, 1, rows, hd), q_map),
                pl.BlockSpec((1, 1, tk, hd), kv_map),
                pl.BlockSpec((1, 1, tk, hd), kv_map),
            ],
            out_specs=pl.BlockSpec((1, 1, rows, hd), q_map),
            scratch_shapes=[
                pltpu.VMEM((rows, 1), jnp.float32),    # running max
                pltpu.VMEM((rows, 1), jnp.float32),    # running sum
                pltpu.VMEM((rows, hd), jnp.float32),   # output accumulator
            ],
        ),
        compiler_params=pltpu.CompilerParams(
            dimension_semantics=("parallel", "parallel", "parallel", "arbitrary"),
        ),
        cost_estimate=pl.CostEstimate(
            flops=4 * B * Hkv * n_rep * S * end_pos * hd,
            transcendentals=B * Hkv * n_rep * S * end_pos,
            bytes_accessed=2 * (2 * B * Hkv * rows_total * hd
                                + 2 * B * Hkv * end_pos * hd),
        ),
    )(qg, k_cache, v_cache)


# ----------------------------------------------------------------------------
# Rotary embeddings (plain JAX, interleaved complex multiply like torch)
# ----------------------------------------------------------------------------
def rope_cos_sin(positions, head_dim, theta=10000.0):
    freqs = 1.0 / (theta ** (jnp.arange(0, head_dim, 2, dtype=jnp.float32) / head_dim))
    ang = positions.astype(jnp.float32)[:, None] * freqs[None, :]
    return jnp.cos(ang), jnp.sin(ang)


def apply_rotary_emb(x, cos, sin):
    # x: (B, S, H, hd); cos/sin: (S, hd//2)
    dtype = x.dtype
    xf = x.astype(jnp.float32)
    xr = xf[..., 0::2]
    xi = xf[..., 1::2]
    c = cos[None, :, None, :]
    s = sin[None, :, None, :]
    yr = xr * c - xi * s
    yi = xr * s + xi * c
    y = jnp.stack([yr, yi], axis=-1).reshape(x.shape)
    return y.astype(dtype)


# ----------------------------------------------------------------------------
# Full GQA forward (functional: returns output + updated caches)
# Cache layout: (max_batch, n_kv_heads, max_seq, head_dim)  -- never transposed.
# ----------------------------------------------------------------------------
def gqa_forward(x, start_pos, cos, sin, params, k_cache, v_cache, cfg):
    B, S, D = x.shape
    H, Hkv = cfg["n_heads"], cfg["n_kv_heads"]
    hd = D // H
    n_rep = H // Hkv

    # fused QKV projection (single tiled Pallas matmul, pre-transposed weight)
    x2d = x.reshape(B * S, D)
    qkv = linear_nn(x2d, params["wqkv_t"])               # (T, (H + 2*Hkv) * hd)
    q_dim, kv_dim = H * hd, Hkv * hd
    q = qkv[:, :q_dim].reshape(B, S, H, hd)
    k = qkv[:, q_dim:q_dim + kv_dim].reshape(B, S, Hkv, hd)
    v = qkv[:, q_dim + kv_dim:].reshape(B, S, Hkv, hd)

    q = apply_rotary_emb(q, cos, sin)
    k = apply_rotary_emb(k, cos, sin)

    # group-major Q layout: (B, Hkv, S*n_rep, hd), rows ordered (position, rep)
    qg = (q.reshape(B, S, Hkv, n_rep, hd)
            .transpose(0, 2, 1, 3, 4)
            .reshape(B, Hkv, S * n_rep, hd))
    kg = jnp.transpose(k, (0, 2, 1, 3))                   # (B, Hkv, S, hd) new only
    vg = jnp.transpose(v, (0, 2, 1, 3))

    # functional KV-cache update (the torch module writes registered buffers
    # in place); only the S new tokens move, the cache keeps its layout.
    k_cache = jax.lax.dynamic_update_slice(
        k_cache, kg.astype(k_cache.dtype), (0, 0, start_pos, 0))
    v_cache = jax.lax.dynamic_update_slice(
        v_cache, vg.astype(v_cache.dtype), (0, 0, start_pos, 0))

    o = gqa_attention(qg, k_cache, v_cache,
                      start_pos=start_pos, seqlen=S,
                      n_rep=n_rep, scale=cfg["softmax_scale"])

    # back to (B*S, H*hd) for the output projection (flatten(2) ordering)
    o = (o.reshape(B, Hkv, S, n_rep, hd)
           .transpose(0, 2, 1, 3, 4)
           .reshape(B * S, H * hd))
    out = linear_nn(o, params["wo_t"]).reshape(B, S, D)
    return out, k_cache, v_cache


# ----------------------------------------------------------------------------
# Pure-JAX (f32) reference following the PyTorch module, for a sanity check.
# Uses the torch cache layout (B, T, Hkv, hd) and an explicit additive mask.
# ----------------------------------------------------------------------------
def gqa_reference(x, start_pos, cos, sin, mask, params_pt, k_cache, v_cache,
                  n_heads, n_kv_heads, softmax_scale):
    B, S, D = x.shape
    hd = D // n_heads
    n_rep = n_heads // n_kv_heads
    end_pos = start_pos + S

    xf = x.reshape(B * S, D).astype(jnp.float32)
    wq = params_pt["wq"].astype(jnp.float32)
    wk = params_pt["wk"].astype(jnp.float32)
    wv = params_pt["wv"].astype(jnp.float32)
    wo = params_pt["wo"].astype(jnp.float32)

    q = (xf @ wq.T).reshape(B, S, n_heads, hd)
    k = (xf @ wk.T).reshape(B, S, n_kv_heads, hd)
    v = (xf @ wv.T).reshape(B, S, n_kv_heads, hd)
    q = apply_rotary_emb(q, cos, sin)
    k = apply_rotary_emb(k, cos, sin)

    kc = jax.lax.dynamic_update_slice(
        k_cache, k.astype(k_cache.dtype), (0, start_pos, 0, 0))
    vc = jax.lax.dynamic_update_slice(
        v_cache, v.astype(v_cache.dtype), (0, start_pos, 0, 0))
    keys = jnp.repeat(kc[:B, :end_pos], n_rep, axis=2)    # repeat_interleave
    values = jnp.repeat(vc[:B, :end_pos], n_rep, axis=2)

    scores = jnp.einsum('bshd,bthd->bsht', q, keys) * softmax_scale
    scores = scores + mask[:, None, :].astype(jnp.float32)
    p = jax.nn.softmax(scores, axis=-1)
    out = jnp.einsum('bsht,bthd->bshd', p, values).reshape(B, S, n_heads * hd)
    return out @ wo.T, kc, vc


# ----------------------------------------------------------------------------
# Demo / self-test: a prefill step followed by a short continuation step
# ----------------------------------------------------------------------------
if __name__ == "__main__":
    B = 2
    S1, S2 = 16, 4
    dim = 256
    n_heads, n_kv_heads = 4, 2
    head_dim = dim // n_heads          # 64
    max_batch_size, max_seq_len = 2, 32
    original_seq_len = 4096            # max_seq_len <= original => no mscale adjust
    rope_theta = 10000.0
    rope_factor, mscale_arg = 40.0, 1.0

    softmax_scale = head_dim ** (-0.5)
    if max_seq_len > original_seq_len:  # mirror the module's mscale branch
        mscale = 0.1 * mscale_arg * math.log(rope_factor) + 1.0
        softmax_scale = softmax_scale * mscale * mscale

    key = jax.random.PRNGKey(0)
    ks = jax.random.split(key, 6)
    init = lambda k, shp: (0.05 * jax.random.normal(k, shp, jnp.float32)
                           ).astype(jnp.bfloat16)

    # PyTorch-layout [out, in] weights (source of truth)
    wq = init(ks[0], (n_heads * head_dim, dim))
    wk = init(ks[1], (n_kv_heads * head_dim, dim))
    wv = init(ks[2], (n_kv_heads * head_dim, dim))
    wo = init(ks[3], (dim, n_heads * head_dim))
    x1 = jax.random.normal(ks[4], (B, S1, dim), jnp.float32).astype(jnp.bfloat16)
    x2 = jax.random.normal(ks[5], (B, S2, dim), jnp.float32).astype(jnp.bfloat16)

    # one-time param prep: transpose to [in, out] and fuse Q/K/V
    params = {
        "wqkv_t": jnp.concatenate([wq.T, wk.T, wv.T], axis=1),   # (dim, (H+2Hkv)*hd)
        "wo_t": wo.T,                                             # (H*hd, dim)
    }
    params_pt = {"wq": wq, "wk": wk, "wv": wv, "wo": wo}
    cfg = {"n_heads": n_heads, "n_kv_heads": n_kv_heads,
           "softmax_scale": softmax_scale}

    # kernel-layout caches (never transposed per call)
    k_cache = jnp.zeros((max_batch_size, n_kv_heads, max_seq_len, head_dim),
                        jnp.bfloat16)
    v_cache = jnp.zeros_like(k_cache)
    # torch-layout f32 caches for the reference
    k_cache_ref = jnp.zeros((max_batch_size, max_seq_len, n_kv_heads, head_dim),
                            jnp.float32)
    v_cache_ref = jnp.zeros_like(k_cache_ref)

    def causal_mask(start, s):
        end = start + s
        return jnp.where(
            jnp.arange(end)[None, :] > (start + jnp.arange(s))[:, None],
            -jnp.inf, 0.0).astype(jnp.float32)

    max_err = 0.0
    for x, start in ((x1, 0), (x2, S1)):
        s = x.shape[1]
        cos, sin = rope_cos_sin(jnp.arange(start, start + s), head_dim, rope_theta)

        out, k_cache, v_cache = gqa_forward(
            x, start, cos, sin, params, k_cache, v_cache, cfg)
        out = jax.block_until_ready(out)

        ref, k_cache_ref, v_cache_ref = gqa_reference(
            x, start, cos, sin, causal_mask(start, s), params_pt,
            k_cache_ref, v_cache_ref, n_heads, n_kv_heads, softmax_scale)

        assert out.shape == x.shape and out.dtype == x.dtype
        err = float(jnp.max(jnp.abs(out.astype(jnp.float32) - ref)))
        max_err = max(max_err, err)

    assert max_err < 1e-1, f"mismatch vs reference: {max_err}"
    print("KERNEL_OK")
</pallas_src>

<mosaic_0001>
module attributes {stable_mosaic.version = 11 : i64} {
  func.func @_matmul_kernel(%arg0: i32, %arg1: i32, %arg2: i32, %arg3: memref<32x256xbf16, #tpu.memory_space<vmem>>, %arg4: memref<256x256xbf16, #tpu.memory_space<vmem>>, %arg5: memref<32x256xbf16, #tpu.memory_space<vmem>>, %arg6: memref<32x256xf32, #tpu.memory_space<vmem>>) attributes {dimension_semantics = [#tpu.dimension_semantics<parallel>, #tpu.dimension_semantics<parallel>, #tpu.dimension_semantics<arbitrary>], iteration_bounds = array<i64: 1, 2, 1>, scalar_prefetch = 0 : i64, scratch_operands = 1 : i64, tpu.core_type = #tpu.core_type<tc>, window_params = [{transform_indices = @transform_0, window_bounds = array<i64: 32, 256>}, {transform_indices = @transform_1, window_bounds = array<i64: 256, 256>}, {transform_indices = @transform_2, window_bounds = array<i64: 32, 256>}]} {
    %c0_i32 = arith.constant 0 : i32
    %0 = arith.cmpi eq, %arg2, %c0_i32 : i32
    %1 = arith.extui %0 : i1 to i32
    %c0_i32_0 = arith.constant 0 : i32
    %2 = arith.cmpi ne, %1, %c0_i32_0 : i32
    scf.if %2 {
      %cst_10 = arith.constant 0.000000e+00 : f32
      %12 = vector.broadcast %cst_10 : f32 to vector<32x256xf32>
      %c0_11 = arith.constant 0 : index
      %c0_12 = arith.constant 0 : index
      %13 = vector.load %arg6[%c0_11, %c0_12] : memref<32x256xf32, #tpu.memory_space<vmem>>, vector<32x256xf32>
      tpu.vector_store %arg6[%c0_11, %c0_12], %12 {strides = array<i32>} : memref<32x256xf32, #tpu.memory_space<vmem>>, vector<32x256xf32>,
    } else {
    }
    %c0 = arith.constant 0 : index
    %c0_1 = arith.constant 0 : index
    %3 = vector.load %arg6[%c0, %c0_1] : memref<32x256xf32, #tpu.memory_space<vmem>>, vector<32x256xf32>
    %c0_2 = arith.constant 0 : index
    %c0_3 = arith.constant 0 : index
    %4 = vector.load %arg3[%c0_2, %c0_3] : memref<32x256xbf16, #tpu.memory_space<vmem>>, vector<32x256xbf16>
    %c0_4 = arith.constant 0 : index
    %c0_5 = arith.constant 0 : index
    %5 = vector.load %arg4[%c0_4, %c0_5] : memref<256x256xbf16, #tpu.memory_space<vmem>>, vector<256x256xbf16>
    %cst = arith.constant dense<0.000000e+00> : vector<32x256xf32>
    %6 = tpu.matmul %4, %5, %cst {dimension_numbers = #tpu.dot_dimension_numbers<[1], [0], [0], [1], [0, 0, 1, 1], [], []>} : vector<32x256xbf16>, vector<256x256xbf16>, vector<32x256xf32> -> vector<32x256xf32>
    %7 = arith.addf %3, %6 : vector<32x256xf32>
    %c0_6 = arith.constant 0 : index
    %c0_7 = arith.constant 0 : index
    %8 = vector.load %arg6[%c0_6, %c0_7] : memref<32x256xf32, #tpu.memory_space<vmem>>, vector<32x256xf32>
    tpu.vector_store %arg6[%c0_6, %c0_7], %7 {strides = array<i32>} : memref<32x256xf32, #tpu.memory_space<vmem>>, vector<32x256xf32>,
    %c0_i32_8 = arith.constant 0 : i32
    %9 = arith.cmpi eq, %arg2, %c0_i32_8 : i32
    %10 = arith.extui %9 : i1 to i32
    %c0_i32_9 = arith.constant 0 : i32
    %11 = arith.cmpi ne, %10, %c0_i32_9 : i32
    scf.if %11 {
      %c0_10 = arith.constant 0 : index
      %c0_11 = arith.constant 0 : index
      %12 = vector.load %arg6[%c0_10, %c0_11] : memref<32x256xf32, #tpu.memory_space<vmem>>, vector<32x256xf32>
      %13 = arith.truncf %12 : vector<32x256xf32> to vector<32x256xbf16>
      %c0_12 = arith.constant 0 : index
      %c0_13 = arith.constant 0 : index
      %14 = vector.load %arg5[%c0_12, %c0_13] : memref<32x256xbf16, #tpu.memory_space<vmem>>, vector<32x256xbf16>
      tpu.vector_store %arg5[%c0_12, %c0_13], %13 {strides = array<i32>} : memref<32x256xbf16, #tpu.memory_space<vmem>>, vector<32x256xbf16>,
    } else {
    }
    return
  }
  func.func @transform_0(%arg0: i32, %arg1: i32, %arg2: i32) -> (i32, i32) {
    %c0_i32 = arith.constant 0 : i32
    return %arg0, %arg2 : i32, i32
  }
  func.func @transform_1(%arg0: i32, %arg1: i32, %arg2: i32) -> (i32, i32) {
    %c0_i32 = arith.constant 0 : i32
    return %arg2, %arg1 : i32, i32
  }
  func.func @transform_2(%arg0: i32, %arg1: i32, %arg2: i32) -> (i32, i32) {
    %c0_i32 = arith.constant 0 : i32
    return %arg0, %arg1 : i32, i32
  }
}

</mosaic_0001>

<llo_original>
// kernel: tpu_custom_call.1
$region0: #{tpu_custom_call.1}
  #allocation0 [shape = 'u32[]', space=smem, size = 0x4, offset = 0x4, fixed_abs, tag = 'smem constant byte address 0x4 - core index']
  #allocation1 [shape = 'u32[72,128]{1,0:T(1,128)}', space=vmem, size = 0x9000, scoped, tag = 'internal scratch']
  #allocation2 [shape = 'f32[32,256]{1,0:T(8,128)}', space=vmem, size = 0x8000, scoped, tag = 'scratch operand']
  %s0 = inlined_call_operand.hbm [shape: bf16[32,256], index: 0, kind: input, shape index: {}]
  %s1 = inlined_call_operand.hbm [shape: bf16[256,512], index: 1, kind: input, shape index: {}]
  %s2 = inlined_call_operand.hbm [shape: bf16[32,512], index: 2, kind: output, shape index: {}]
  %s3 = sld [smem:[#allocation0]]
  $region57: #{tpu_custom_call.1} parent=0
    _
  %s5 = ssub.s32 1, %s3
  %s6 = scalar_select 0, %s5, %s3
  $region1: #{tpu_custom_call.1} parent=0
    #allocation3 [shape = 'u8[16384]{0}', space=vmem, size = 0x4000, scoped, tag = 'input window, operand 0, single buffered']
    #allocation4 [shape = 's32[2]{0}', space=sflag, size = 0x8, scoped, tag = 'scoped memory for tpu_custom_call.1']
    #allocation5 [shape = 's32[2]{0}', space=sflag, size = 0x8, scoped, tag = 'scoped memory for tpu_custom_call.1']
    #allocation6 [shape = 'u8[262144]{0}', space=vmem, size = 0x40000, scoped, tag = 'input window, operand 1']
    #allocation7 [shape = 's32[2]{0}', space=sflag, size = 0x8, scoped, tag = 'scoped memory for tpu_custom_call.1']
    #allocation8 [shape = 'u8[32768]{0}', space=vmem, size = 0x8000, scoped, tag = 'output window, operand 0']
    %7 = vsyncpa [#allocation4], 0
    %8 = vsyncpa [#allocation7], 0
    %s9 = scalar_lea.sflag [#allocation7], 1
    %10 = vsyncpa %s9, 0
    %11 = vsyncpa [#allocation5], 0
    %s12 = scalar_lea.sflag [#allocation5], 1
    %13 = vsyncpa %s12, 0
    loop: start=0, step=1, limit=4
    $region2: #{tpu_custom_call.1} parent=1 // loop_pre_header
      _
    $region3: #{tpu_custom_call.1} parent=1 // loop_header
      %s15 = sphi 0, %s19
      %p16 = scmp.ge.s32.totalorder %s15, 4
      %s22 = sphi 0, %s41
      %s23 = sphi 0, %s37
      %s24 = sphi 0, %s33
      %s25 = sphi 0, %s22
      %s26 = sphi 0, %s23
      %s27 = sphi 0, %s24
      %s28 = sphi 0, %s25
      %s29 = sphi 0, %s26
      %s30 = sphi 0, %s27
      %s46 = sphi 0, %s48
      %s49 = sphi 0, %s46
      %s50 = sphi 0, %s49
      %s66 = sphi 0, %s50
      %s74 = sphi 0, %s76
      %s77 = sphi 0, %s74
      %s78 = sphi 0, %s77
      %s94 = sphi 0, %s78
      %s102 = sphi 0, %s104
      %s105 = sphi 0, %s102
      %s106 = sphi 0, %s105
      %s122 = sphi 0, %s106
    $region4: #{tpu_custom_call.1} parent=1 // loop_header_branch
      %18 = sbr.rel (%p16) target = $region8
    $region5: #{tpu_custom_call.1} parent=1 // loop_body
      %s20 = ssub.s32 %s15, 1
      %s21 = ssub.s32 %s15, 2
      %s31 = sadd.s32 1, %s24
      %p32 = scmp.ge.s32.totalorder %s31, 1
      %s33 = scalar_select %p32, 0, %s31
      %s34 = sadd.s32 1, %s23
      %s35 = scalar_select %p32, %s34, %s23
      %p36 = scmp.ge.s32.totalorder %s35, 2
      %s37 = scalar_select %p36, 0, %s35
      %s38 = sadd.s32 1, %s22
      %s39 = scalar_select %p36, %s38, %s22
      %p40 = scmp.ge.s32.totalorder %s39, 1
      %s41 = scalar_select %p40, 0, %s39
      %s42 = ssub.s32 %s22, %s41
      %s43 = ssub.s32 %s24, %s33
      %s44 = sor.u32 %s42, %s43
      %p45 = scmp.eq.s32.totalorder %s44, 0
      %s47 = sadd.s32 %s46, 1
      %s48 = scalar_select %p45, %s46, %s47
      %p51 = pneg %p45
      %p52 = scmp.eq.s32.totalorder %s15, 1
      %p53 = por %p51, %p52
      %p54 = scmp.ne.s32.totalorder %s46, %s49
      %p55 = scmp.eq.s32.totalorder %s15, 0
      %p56 = por %p54, %p55
      %p57 = scmp.ne.s32.totalorder %s46, %s49
      %p58 = scmp.eq.s32.totalorder %s20, 1
      %p59 = por %p57, %p58
      %p60 = scmp.ne.s32.totalorder %s49, %s50
      %p61 = scmp.eq.s32.totalorder %s20, 0
      %p62 = por %p60, %p61
      %p63 = scmp.ne.s32.totalorder %s49, %s50
      %p64 = scmp.eq.s32.totalorder %s21, 1
      %p65 = por %p63, %p64
      %p67 = scmp.ne.s32.totalorder %s50, %s66
      %p68 = scmp.eq.s32.totalorder %s21, 0
      %p69 = por %p67, %p68
      %s70 = ssub.s32 %s24, %s33
      %s71 = ssub.s32 %s23, %s37
      %s72 = sor.u32 %s70, %s71
      %p73 = scmp.eq.s32.totalorder %s72, 0
      %s75 = sadd.s32 %s74, 1
      %s76 = scalar_select %p73, %s74, %s75
      %p79 = pneg %p73
      %p80 = scmp.eq.s32.totalorder %s15, 1
      %p81 = por %p79, %p80
      %p82 = scmp.ne.s32.totalorder %s74, %s77
      %p83 = scmp.eq.s32.totalorder %s15, 0
      %p84 = por %p82, %p83
      %p85 = scmp.ne.s32.totalorder %s74, %s77
      %p86 = scmp.eq.s32.totalorder %s20, 1
      %p87 = por %p85, %p86
      %p88 = scmp.ne.s32.totalorder %s77, %s78
      %p89 = scmp.eq.s32.totalorder %s20, 0
      %p90 = por %p88, %p89
      %p91 = scmp.ne.s32.totalorder %s77, %s78
      %p92 = scmp.eq.s32.totalorder %s21, 1
      %p93 = por %p91, %p92
      %p95 = scmp.ne.s32.totalorder %s78, %s94
      %p96 = scmp.eq.s32.totalorder %s21, 0
      %p97 = por %p95, %p96
      %s98 = ssub.s32 %s22, %s41
      %s99 = ssub.s32 %s23, %s37
      %s100 = sor.u32 %s98, %s99
      %p101 = scmp.eq.s32.totalorder %s100, 0
      %s103 = sadd.s32 %s102, 1
      %s104 = scalar_select %p101, %s102, %s103
      %p107 = pneg %p101
      %p108 = scmp.eq.s32.totalorder %s15, 1
      %p109 = por %p107, %p108
      %p110 = scmp.ne.s32.totalorder %s102, %s105
      %p111 = scmp.eq.s32.totalorder %s15, 0
      %p112 = por %p110, %p111
      %p113 = scmp.ne.s32.totalorder %s102, %s105
      %p114 = scmp.eq.s32.totalorder %s20, 1
      %p115 = por %p113, %p114
      %p116 = scmp.ne.s32.totalorder %s105, %s106
      %p117 = scmp.eq.s32.totalorder %s20, 0
      %p118 = por %p116, %p117
      %p119 = scmp.ne.s32.totalorder %s105, %s106
      %p120 = scmp.eq.s32.totalorder %s21, 1
      %p121 = por %p119, %p120
      %p123 = scmp.ne.s32.totalorder %s106, %s122
      %p124 = scmp.eq.s32.totalorder %s21, 0
      %p125 = por %p123, %p124
      %p126 = scmp.le.s32.totalorder 1, %s15
      %p127 = scmp.lt.s32.totalorder %s15, 3
      %p128 = pnand %p126, %p127
      %p129 = pneg %p128
      // Predicated region
      $region9: #{tpu_custom_call.1} parent=5 // pred_check
        _
      $region10: #{tpu_custom_call.1} parent=5 // pred_check_branch
        %131 = sbr.rel (%p128) target = $region12
      $region11: #{tpu_custom_call.1} parent=5 // pred_region
        %s132 = ssub.s32 %s15, 1
        // Predicated region
        $region13: #{tpu_custom_call.1} parent=11 // pred_check
          %p133 = pneg %p62
        $region14: #{tpu_custom_call.1} parent=11 // pred_check_branch
          %135 = sbr.rel (%p133) target = $region16
        $region15: #{tpu_custom_call.1} parent=11 // pred_region
          %s136 = smul.u32 4, %s25
          %s137 = smul.u32 2, %s27
          %139 = vsyncadd [#allocation4], 0
          %s140 = smul.addr %s136, 2
          %s141 = sadd.s32 %s137, %s140
          %s142 = smul.addr %s141, 4
          %s143 = scalar_lea.hbm %s0, %s142
          %s144 = sshll.u32 %s143, 4
          %s145 = int_to_ptr.hbm [resolvable:$true] %s144
          %s146 = sshll.u32 [#allocation3], 4
          %s147 = int_to_ptr.vmem [resolvable:$true] %s146
          %152 = dma.hbm_to_vmem [thread:$0]  %s145, 512, %s147, [#allocation4], 128, 128, 8
        $region16: #{tpu_custom_call.1} parent=11 // pred_fallthru
          _
      $region12: #{tpu_custom_call.1} parent=5 // pred_fallthru
        _
      %p153 = scmp.lt.s32.totalorder %s15, 2
      // Predicated region
      $region17: #{tpu_custom_call.1} parent=5 // pred_check
        %p154 = pneg %p153
      $region18: #{tpu_custom_call.1} parent=5 // pred_check_branch
        %156 = sbr.rel (%p154) target = $region20
      $region19: #{tpu_custom_call.1} parent=5 // pred_region
        // Predicated region
        $region21: #{tpu_custom_call.1} parent=19 // pred_check
          %p157 = pneg %p84
        $region22: #{tpu_custom_call.1} parent=19 // pred_check_branch
          %159 = sbr.rel (%p157) target = $region24
        $region23: #{tpu_custom_call.1} parent=19 // pred_region
          %s160 = sand.u32 %s74, 1
          %s161 = scalar_lea.sflag [#allocation7], %s160
          %s162 = sand.u32 %s74, 1
          %s163 = smul.addr %s162, 256
          %s164 = scalar_lea.vmem [#allocation6], %s163
          %s165 = smul.u32 32, %s24
          %s166 = smul.u32 2, %s23
          %168 = vsyncadd %s161, 0
          %s169 = smul.addr %s165, 4
          %s170 = sadd.s32 %s166, %s169
          %s171 = smul.addr %s170, 4
          %s172 = scalar_lea.hbm %s1, %s171
          %s173 = sshll.u32 %s172, 4
          %s174 = int_to_ptr.hbm [resolvable:$true] %s173
          %s175 = sshll.u32 %s164, 4
          %s176 = int_to_ptr.vmem [resolvable:$true] %s175
          %181 = dma.hbm_to_vmem [thread:$0]  %s174, 4096, %s176, %s161, 256, 128, 8
        $region24: #{tpu_custom_call.1} parent=19 // pred_fallthru
          _
      $region20: #{tpu_custom_call.1} parent=5 // pred_fallthru
        _
      %p182 = scmp.le.s32.totalorder 1, %s15
      %p183 = scmp.lt.s32.totalorder %s15, 3
      %p184 = pnand %p182, %p183
      %p185 = pneg %p184
      // Predicated region
      $region25: #{tpu_custom_call.1} parent=5 // pred_check
        _
      $region26: #{tpu_custom_call.1} parent=5 // pred_check_branch
        %187 = sbr.rel (%p184) target = $region28
      $region27: #{tpu_custom_call.1} parent=5 // pred_region
        %s188 = ssub.s32 %s15, 1
        // Predicated region
        $region29: #{tpu_custom_call.1} parent=27 // pred_check
          %p189 = pneg %p62
        $region30: #{tpu_custom_call.1} parent=27 // pred_check_branch
          %191 = sbr.rel (%p189) target = $region32
        $region31: #{tpu_custom_call.1} parent=27 // pred_region
          %193 = dma.done [#allocation4], 512
        $region32: #{tpu_custom_call.1} parent=27 // pred_fallthru
          _
        %s194 = sand.u32 %s77, 1
        %s195 = scalar_lea.sflag [#allocation7], %s194
        %s196 = sand.u32 %s77, 1
        %s197 = smul.addr %s196, 256
        %s198 = scalar_lea.vmem [#allocation6], %s197
        // Predicated region
        $region33: #{tpu_custom_call.1} parent=27 // pred_check
          %p199 = pneg %p90
        $region34: #{tpu_custom_call.1} parent=27 // pred_check_branch
          %201 = sbr.rel (%p199) target = $region36
        $region35: #{tpu_custom_call.1} parent=27 // pred_region
          %203 = dma.done %s195, 4096
        $region36: #{tpu_custom_call.1} parent=27 // pred_fallthru
          _
        %p204 = pneg %p62
        %p205 = pneg %p59
        %s206 = sand.u32 %s77, 1
        %s207 = scalar_lea.sflag [#allocation7], %s206
        %s208 = sand.u32 %s77, 1
        %s209 = smul.addr %s208, 256
        %s210 = scalar_lea.vmem [#allocation6], %s209
        %p211 = pneg %p90
        %p212 = pneg %p87
        %p213 = pneg %p118
        %p214 = pneg %p115
        %s215 = sand.u32 %s105, 1
        %s216 = scalar_lea.sflag [#allocation5], %s215
        %s217 = sand.u32 %s105, 1
        %s218 = smul.addr %s217, 32
        %s219 = scalar_lea.vmem [#allocation8], %s218
        %s220 = smul.u32 4, %s25
        %s221 = smul.u32 2, %s27
        %s222 = smul.u32 32, %s27
        %s223 = smul.u32 2, %s26
        %s224 = smul.u32 4, %s25
        %s225 = smul.u32 2, %s26
        %p226 = scmp.eq.s32.totalorder %s27, 0
        // Predicated region
        $region37: #{tpu_custom_call.1} parent=27 // pred_check
          %p227 = pneg %p226
        $region38: #{tpu_custom_call.1} parent=27 // pred_check_branch
          %229 = sbr.rel (%p227) target = $region40
        $region39: #{tpu_custom_call.1} parent=27 // pred_region
          %230 = vst [vmem:[#allocation2] sm:$0xff] 0.0
          %231 = vst [vmem:[#allocation2 + $0x8] sm:$0xff] 0.0
          %232 = vst [vmem:[#allocation2 + $0x10] sm:$0xff] 0.0
          %233 = vst [vmem:[#allocation2 + $0x18] sm:$0xff] 0.0
          %234 = vst [vmem:[#allocation2 + $0x20] sm:$0xff] 0.0
          %235 = vst [vmem:[#allocation2 + $0x28] sm:$0xff] 0.0
          %236 = vst [vmem:[#allocation2 + $0x30] sm:$0xff] 0.0
          %237 = vst [vmem:[#allocation2 + $0x38] sm:$0xff] 0.0
        $region40: #{tpu_custom_call.1} parent=27 // pred_fallthru
          _
        %v238 = vld [vmem:[#allocation2] sm:$0xff]
        %v239 = vld [vmem:[#allocation2 + $0x8] sm:$0xff]
        %v240 = vld [vmem:[#allocation2 + $0x10] sm:$0xff]
        %v241 = vld [vmem:[#allocation2 + $0x18] sm:$0xff]
        %v242 = vld [vmem:[#allocation2 + $0x20] sm:$0xff]
        %v243 = vld [vmem:[#allocation2 + $0x28] sm:$0xff]
        %v244 = vld [vmem:[#allocation2 + $0x30] sm:$0xff]
        %v245 = vld [vmem:[#allocation2 + $0x38] sm:$0xff]
        %v246 = vld [vmem:[#allocation3] sm:$0xff]
        %v247 = vld [vmem:[#allocation3 + $0x8] sm:$0xff]
        %v248 = vld [vmem:[#allocation3 + $0x10] sm:$0xff]
        %v249 = vld [vmem:[#allocation3 + $0x18] sm:$0xff]
        %v250 = vld [vmem:[%s198] sm:$0xff]
        %v251 = vld [vmem:[%s198 + $0x8] sm:$0xff]
        %v252 = vld [vmem:[%s198 + $0x10] sm:$0xff]
        %v253 = vld [vmem:[%s198 + $0x18] sm:$0xff]
        %v254 = vld [vmem:[%s198 + $0x20] sm:$0xff]
        %v255 = vld [vmem:[%s198 + $0x28] sm:$0xff]
        %v256 = vld [vmem:[%s198 + $0x30] sm:$0xff]
        %v257 = vld [vmem:[%s198 + $0x38] sm:$0xff]
        %v258 = vld [vmem:[%s198 + $0x40] sm:$0xff]
        %v259 = vld [vmem:[%s198 + $0x48] sm:$0xff]
        %v260 = vld [vmem:[%s198 + $0x50] sm:$0xff]
        %v261 = vld [vmem:[%s198 + $0x58] sm:$0xff]
        %v262 = vld [vmem:[%s198 + $0x60] sm:$0xff]
        %v263 = vld [vmem:[%s198 + $0x68] sm:$0xff]
        %v264 = vld [vmem:[%s198 + $0x70] sm:$0xff]
        %v265 = vld [vmem:[%s198 + $0x78] sm:$0xff]
        %v266 = vld [vmem:[%s198 + $0x80] sm:$0xff]
        %v267 = vld [vmem:[%s198 + $0x88] sm:$0xff]
        %v268 = vld [vmem:[%s198 + $0x90] sm:$0xff]
        %v269 = vld [vmem:[%s198 + $0x98] sm:$0xff]
        %v270 = vld [vmem:[%s198 + $0xa0] sm:$0xff]
        %v271 = vld [vmem:[%s198 + $0xa8] sm:$0xff]
        %v272 = vld [vmem:[%s198 + $0xb0] sm:$0xff]
        %v273 = vld [vmem:[%s198 + $0xb8] sm:$0xff]
        %v274 = vld [vmem:[%s198 + $0xc0] sm:$0xff]
        %v275 = vld [vmem:[%s198 + $0xc8] sm:$0xff]
        %v276 = vld [vmem:[%s198 + $0xd0] sm:$0xff]
        %v277 = vld [vmem:[%s198 + $0xd8] sm:$0xff]
        %v278 = vld [vmem:[%s198 + $0xe0] sm:$0xff]
        %v279 = vld [vmem:[%s198 + $0xe8] sm:$0xff]
        %v280 = vld [vmem:[%s198 + $0xf0] sm:$0xff]
        %v281 = vld [vmem:[%s198 + $0xf8] sm:$0xff]
        %v286 = vunpack.c.l.b16 %v246
        %v287 = vunpack.c.h.b16 %v246
        %v288 = vunpack.c.l.b16 %v247
        %v289 = vunpack.c.h.b16 %v247
        %v290 = vunpack.c.l.b16 %v248
        %v291 = vunpack.c.h.b16 %v248
        %v292 = vunpack.c.l.b16 %v249
        %v293 = vunpack.c.h.b16 %v249
        %v294 = vpack.c.b16 %v288, %v286
        %v295 = vpack.c.b16 %v289, %v287
        %v296 = vpack.c.b16 %v292, %v290
        %v297 = vpack.c.b16 %v293, %v291
        %v334 = vunpack.c.l.b16 %v250
        %v335 = vunpack.c.h.b16 %v250
        %v336 = vunpack.c.l.b16 %v251
        %v337 = vunpack.c.h.b16 %v251
        %v338 = vunpack.c.l.b16 %v252
        %v339 = vunpack.c.h.b16 %v252
        %v340 = vunpack.c.l.b16 %v253
        %v341 = vunpack.c.h.b16 %v253
        %v342 = vunpack.c.l.b16 %v254
        %v343 = vunpack.c.h.b16 %v254
        %v344 = vunpack.c.l.b16 %v255
        %v345 = vunpack.c.h.b16 %v255
        %v346 = vunpack.c.l.b16 %v256
        %v347 = vunpack.c.h.b16 %v256
        %v348 = vunpack.c.l.b16 %v257
        %v349 = vunpack.c.h.b16 %v257
        %v350 = vunpack.c.l.b16 %v258
        %v351 = vunpack.c.h.b16 %v258
        %v352 = vunpack.c.l.b16 %v259
        %v353 = vunpack.c.h.b16 %v259
        %v354 = vunpack.c.l.b16 %v260
        %v355 = vunpack.c.h.b16 %v260
        %v356 = vunpack.c.l.b16 %v261
        %v357 = vunpack.c.h.b16 %v261
        %v358 = vunpack.c.l.b16 %v262
        %v359 = vunpack.c.h.b16 %v262
        %v360 = vunpack.c.l.b16 %v263
        %v361 = vunpack.c.h.b16 %v263
        %v362 = vunpack.c.l.b16 %v264
        %v363 = vunpack.c.h.b16 %v264
        %v364 = vunpack.c.l.b16 %v265
        %v365 = vunpack.c.h.b16 %v265
        %v366 = vunpack.c.l.b16 %v266
        %v367 = vunpack.c.h.b16 %v266
        %v368 = vunpack.c.l.b16 %v267
        %v369 = vunpack.c.h.b16 %v267
        %v370 = vunpack.c.l.b16 %v268
        %v371 = vunpack.c.h.b16 %v268
        %v372 = vunpack.c.l.b16 %v269
        %v373 = vunpack.c.h.b16 %v269
        %v374 = vunpack.c.l.b16 %v270
        %v375 = vunpack.c.h.b16 %v270
        %v376 = vunpack.c.l.b16 %v271
        %v377 = vunpack.c.h.b16 %v271
        %v378 = vunpack.c.l.b16 %v272
        %v379 = vunpack.c.h.b16 %v272
        %v380 = vunpack.c.l.b16 %v273
        %v381 = vunpack.c.h.b16 %v273
        %v382 = vunpack.c.l.b16 %v274
        %v383 = vunpack.c.h.b16 %v274
        %v384 = vunpack.c.l.b16 %v275
        %v385 = vunpack.c.h.b16 %v275
        %v386 = vunpack.c.l.b16 %v276
        %v387 = vunpack.c.h.b16 %v276
        %v388 = vunpack.c.l.b16 %v277
        %v389 = vunpack.c.h.b16 %v277
        %v390 = vunpack.c.l.b16 %v278
        %v391 = vunpack.c.h.b16 %v278
        %v392 = vunpack.c.l.b16 %v279
        %v393 = vunpack.c.h.b16 %v279
        %v394 = vunpack.c.l.b16 %v280
        %v395 = vunpack.c.h.b16 %v280
        %v396 = vunpack.c.l.b16 %v281
        %v397 = vunpack.c.h.b16 %v281
        %v398 = vpack.c.b16 %v336, %v334
        %v399 = vpack.c.b16 %v337, %v335
        %v400 = vpack.c.b16 %v340, %v338
        %v401 = vpack.c.b16 %v341, %v339
        %v402 = vpack.c.b16 %v344, %v342
        %v403 = vpack.c.b16 %v345, %v343
        %v404 = vpack.c.b16 %v348, %v346
        %v405 = vpack.c.b16 %v349, %v347
        %v406 = vpack.c.b16 %v352, %v350
        %v407 = vpack.c.b16 %v353, %v351
        %v408 = vpack.c.b16 %v356, %v354
        %v409 = vpack.c.b16 %v357, %v355
        %v410 = vpack.c.b16 %v360, %v358
        %v411 = vpack.c.b16 %v361, %v359
        %v412 = vpack.c.b16 %v364, %v362
        %v413 = vpack.c.b16 %v365, %v363
        %v414 = vpack.c.b16 %v368, %v366
        %v415 = vpack.c.b16 %v369, %v367
        %v416 = vpack.c.b16 %v372, %v370
        %v417 = vpack.c.b16 %v373, %v371
        %v418 = vpack.c.b16 %v376, %v374
        %v419 = vpack.c.b16 %v377, %v375
        %v420 = vpack.c.b16 %v380, %v378
        %v421 = vpack.c.b16 %v381, %v379
        %v422 = vpack.c.b16 %v384, %v382
        %v423 = vpack.c.b16 %v385, %v383
        %v424 = vpack.c.b16 %v388, %v386
        %v425 = vpack.c.b16 %v389, %v387
        %v426 = vpack.c.b16 %v392, %v390
        %v427 = vpack.c.b16 %v393, %v391
        %v428 = vpack.c.b16 %v396, %v394
        %v429 = vpack.c.b16 %v397, %v395
        %462 = vmatpush.bf16.msra.mxu0 %v412
        %463 = vmatpush.bf16.msra.mxu0 %v410
        %464 = vmatpush.bf16.msra.mxu0 %v408
        %465 = vmatpush.bf16.msra.mxu0 %v406
        %466 = vmatpush.bf16.msra.mxu0 %v404
        %467 = vmatpush.bf16.msra.mxu0 %v402
        %468 = vmatpush.bf16.msra.mxu0 %v400
        %469 = vmatpush.bf16.msra.mxu0 %v398
        %470 = vmatmul.bf16.gmra.mxu0 %v294
        %v471 = vpop.f32.mrf.mxu0
        %v472 = vadd.f32 0.0, %v471
        %v473 = vpop.f32.mrf.mxu0
        %v474 = vadd.f32 0.0, %v473
        %475 = vmatmul.bf16.gmra.mxu0 %v296
        %v476 = vpop.f32.mrf.mxu0
        %v477 = vadd.f32 0.0, %v476
        %v478 = vpop.f32.mrf.mxu0
        %v479 = vadd.f32 0.0, %v478
        %480 = vdwg.mxu0
        %481 = vmatpush.bf16.msra.mxu0 %v428
        %482 = vmatpush.bf16.msra.mxu0 %v426
        %483 = vmatpush.bf16.msra.mxu0 %v424
        %484 = vmatpush.bf16.msra.mxu0 %v422
        %485 = vmatpush.bf16.msra.mxu0 %v420
        %486 = vmatpush.bf16.msra.mxu0 %v418
        %487 = vmatpush.bf16.msra.mxu0 %v416
        %488 = vmatpush.bf16.msra.mxu0 %v414
        %489 = vmatmul.bf16.gmra.mxu0 %v295
        %v490 = vpop.f32.mrf.mxu0
        %v491 = vadd.f32 %v472, %v490
        %v492 = vpop.f32.mrf.mxu0
        %v493 = vadd.f32 %v474, %v492
        %494 = vmatmul.bf16.gmra.mxu0 %v297
        %v495 = vpop.f32.mrf.mxu0
        %v496 = vadd.f32 %v477, %v495
        %v497 = vpop.f32.mrf.mxu0
        %v498 = vadd.f32 %v479, %v497
        %499 = vdwg.mxu0
        %500 = vmatpush.bf16.msra.mxu0 %v413
        %501 = vmatpush.bf16.msra.mxu0 %v411
        %502 = vmatpush.bf16.msra.mxu0 %v409
        %503 = vmatpush.bf16.msra.mxu0 %v407
        %504 = vmatpush.bf16.msra.mxu0 %v405
        %505 = vmatpush.bf16.msra.mxu0 %v403
        %506 = vmatpush.bf16.msra.mxu0 %v401
        %507 = vmatpush.bf16.msra.mxu0 %v399
        %508 = vmatmul.bf16.gmra.mxu0 %v294
        %v509 = vpop.f32.mrf.mxu0
        %v510 = vadd.f32 0.0, %v509
        %v511 = vpop.f32.mrf.mxu0
        %v512 = vadd.f32 0.0, %v511
        %513 = vmatmul.bf16.gmra.mxu0 %v296
        %v514 = vpop.f32.mrf.mxu0
        %v515 = vadd.f32 0.0, %v514
        %v516 = vpop.f32.mrf.mxu0
        %v517 = vadd.f32 0.0, %v516
        %518 = vdwg.mxu0
        %519 = vmatpush.bf16.msra.mxu0 %v429
        %520 = vmatpush.bf16.msra.mxu0 %v427
        %521 = vmatpush.bf16.msra.mxu0 %v425
        %522 = vmatpush.bf16.msra.mxu0 %v423
        %523 = vmatpush.bf16.msra.mxu0 %v421
        %524 = vmatpush.bf16.msra.mxu0 %v419
        %525 = vmatpush.bf16.msra.mxu0 %v417
        %526 = vmatpush.bf16.msra.mxu0 %v415
        %527 = vmatmul.bf16.gmra.mxu0 %v295
        %v528 = vpop.f32.mrf.mxu0
        %v529 = vadd.f32 %v510, %v528
        %v530 = vpop.f32.mrf.mxu0
        %v531 = vadd.f32 %v512, %v530
        %532 = vmatmul.bf16.gmra.mxu0 %v297
        %v533 = vpop.f32.mrf.mxu0
        %v534 = vadd.f32 %v515, %v533
        %v535 = vpop.f32.mrf.mxu0
        %v536 = vadd.f32 %v517, %v535
        %537 = vdwg.mxu0
        %v538 = vadd.f32 %v238, %v491
        %v539 = vadd.f32 %v239, %v529
        %v540 = vadd.f32 %v240, %v493
        %v541 = vadd.f32 %v241, %v531
        %v542 = vadd.f32 %v242, %v496
        %v543 = vadd.f32 %v243, %v534
        %v544 = vadd.f32 %v244, %v498
        %v545 = vadd.f32 %v245, %v536
        %546 = vst [vmem:[#allocation2] sm:$0xff] %v538
        %547 = vst [vmem:[#allocation2 + $0x8] sm:$0xff] %v539
        %548 = vst [vmem:[#allocation2 + $0x10] sm:$0xff] %v540
        %549 = vst [vmem:[#allocation2 + $0x18] sm:$0xff] %v541
        %550 = vst [vmem:[#allocation2 + $0x20] sm:$0xff] %v542
        %551 = vst [vmem:[#allocation2 + $0x28] sm:$0xff] %v543
        %552 = vst [vmem:[#allocation2 + $0x30] sm:$0xff] %v544
        %553 = vst [vmem:[#allocation2 + $0x38] sm:$0xff] %v545
        // Predicated region
        $region41: #{tpu_custom_call.1} parent=27 // pred_check
          %p554 = pneg %p226
        $region42: #{tpu_custom_call.1} parent=27 // pred_check_branch
          %556 = sbr.rel (%p554) target = $region44
        $region43: #{tpu_custom_call.1} parent=27 // pred_region
          %v557 = vld [vmem:[#allocation2] sm:$0xff]
          %v558 = vld [vmem:[#allocation2 + $0x8] sm:$0xff]
          %v559 = vld [vmem:[#allocation2 + $0x10] sm:$0xff]
          %v560 = vld [vmem:[#allocation2 + $0x18] sm:$0xff]
          %v561 = vld [vmem:[#allocation2 + $0x20] sm:$0xff]
          %v562 = vld [vmem:[#allocation2 + $0x28] sm:$0xff]
          %v563 = vld [vmem:[#allocation2 + $0x30] sm:$0xff]
          %v564 = vld [vmem:[#allocation2 + $0x38] sm:$0xff]
          %v565 = vpack.c.bf16 %v558, %v557
          %v566 = vpack.c.bf16 %v560, %v559
          %v567 = vpack.c.bf16 %v562, %v561
          %v568 = vpack.c.bf16 %v564, %v563
          %569 = vst [vmem:[%s219] sm:$0xff] %v565
          %570 = vst [vmem:[%s219 + $0x8] sm:$0xff] %v566
          %571 = vst [vmem:[%s219 + $0x10] sm:$0xff] %v567
          %572 = vst [vmem:[%s219 + $0x18] sm:$0xff] %v568
        $region44: #{tpu_custom_call.1} parent=27 // pred_fallthru
          _
        %s573 = sand.u32 %s105, 1
        %s574 = scalar_lea.sflag [#allocation5], %s573
        %s575 = sand.u32 %s105, 1
        %s576 = smul.addr %s575, 32
        %s577 = scalar_lea.vmem [#allocation8], %s576
        // Predicated region
        $region45: #{tpu_custom_call.1} parent=27 // pred_check
          %p578 = pneg %p115
        $region46: #{tpu_custom_call.1} parent=27 // pred_check_branch
          %580 = sbr.rel (%p578) target = $region48
        $region47: #{tpu_custom_call.1} parent=27 // pred_region
          %s581 = smul.u32 4, %s25
          %s582 = smul.u32 2, %s26
          %584 = vsyncadd %s574, 0
          %s585 = smul.addr %s581, 4
          %s586 = sadd.s32 %s582, %s585
          %s587 = smul.addr %s586, 4
          %s588 = scalar_lea.hbm %s2, %s587
          %s589 = sshll.u32 %s577, 4
          %s590 = int_to_ptr.vmem [resolvable:$true] %s589
          %s591 = sshll.u32 %s588, 4
          %s592 = int_to_ptr.hbm [resolvable:$true] %s591
          %597 = dma.vmem_to_hbm [thread:$0]  %s590, 512, %s592, %s574, 128, 256, 8
        $region48: #{tpu_custom_call.1} parent=27 // pred_fallthru
          _
      $region28: #{tpu_custom_call.1} parent=5 // pred_fallthru
        _
      %p598 = scmp.le.s32.totalorder 2, %s15
      // Predicated region
      $region49: #{tpu_custom_call.1} parent=5 // pred_check
        %p599 = pneg %p598
      $region50: #{tpu_custom_call.1} parent=5 // pred_check_branch
        %601 = sbr.rel (%p599) target = $region52
      $region51: #{tpu_custom_call.1} parent=5 // pred_region
        %s602 = ssub.s32 %s15, 2
        // Predicated region
        $region53: #{tpu_custom_call.1} parent=51 // pred_check
          %p603 = pneg %p121
        $region54: #{tpu_custom_call.1} parent=51 // pred_check_branch
          %605 = sbr.rel (%p603) target = $region56
        $region55: #{tpu_custom_call.1} parent=51 // pred_region
          %s606 = sand.u32 %s106, 1
          %s607 = scalar_lea.sflag [#allocation5], %s606
          %s608 = sand.u32 %s106, 1
          %s609 = smul.addr %s608, 32
          %s610 = scalar_lea.vmem [#allocation8], %s609
          %612 = dma.done %s607, 512
        $region56: #{tpu_custom_call.1} parent=51 // pred_fallthru
          _
      $region52: #{tpu_custom_call.1} parent=5 // pred_fallthru
        _
    $region6: #{tpu_custom_call.1} parent=1 // loop_footer
      %s19 = sadd.s32 1, %s15
    $region7: #{tpu_custom_call.1} parent=1 // loop_footer_branch
      %14 = sbr.rel target = $region3
    $region8: #{tpu_custom_call.1} parent=1 // loop_exit
      _
    %613 = vsyncpa [#allocation4], 1
    %s614 = scalar_lea.sflag [#allocation4], 1
    %615 = vsyncpa %s614, 1
    %616 = vsyncpa [#allocation7], 1
    %s617 = scalar_lea.sflag [#allocation7], 1
    %618 = vsyncpa %s617, 1
    %619 = vsyncpa [#allocation5], 1
    %s620 = scalar_lea.sflag [#allocation5], 1
    %621 = vsyncpa %s620, 1

</llo_original>
